<compile_context>
chip_gen: v7x
topology: tpu7x:2x2x1
jax: 0.10.0
libtpu: 0.0.40
codegen_flags: <defaults>
</compile_context>

<pallas_src>
import jax
import jax.numpy as jnp
from jax.experimental import pallas as pl
from jax.experimental.pallas import tpu as pltpu

WORLD_SIZE = 4              # simulated dist.get_world_size()
B, S, H, O = 2, 8, 32, 32    # batch, seq, hidden, out (small seq2seq shapes)

LANE = 128
SUBLANE = 8
# Row tile for the flat (rows, 128) param/grad kernels.
# 2048 rows * 128 lanes = 256K f32 elems = 1 MiB per rank per grid step.
# allreduce block footprint: (W + 1) * 1 MiB = 5 MiB, double-buffered ~10 MiB.
MAX_ROW_TILE = 2048
FLAT_VMEM_LIMIT = 32 * 1024 * 1024  # explicit (v5e scoped default is ~16 MiB)


def _round_up(x, m):
    return ((x + m - 1) // m) * m


def _rows_for(numel):
    """Sublane-dense, tile-divisible row count for `numel` flat elements."""
    rows = -(-max(numel, 1) // LANE)            # ceil(numel / 128)
    rows = _round_up(rows, SUBLANE)             # sublane-dense vregs
    if rows > MAX_ROW_TILE:
        rows = _round_up(rows, MAX_ROW_TILE)    # even grid, no ragged tail
    return rows


def _tile_for_rows(rows):
    return min(rows, MAX_ROW_TILE)


# ---------------------------------------------------------------------------
# flatten / unflatten (equivalent of _flatten_dense_tensors /
# _unflatten_dense_tensors).  Padding to a lane/sublane/tile-aligned (rows,
# 128) slab happens HERE, once, at allocation time -- the collective kernels
# below never re-pad or slice the bucket.
# ---------------------------------------------------------------------------
def flatten_dense(tensors):
    flat = jnp.concatenate([t.ravel() for t in tensors])
    n = flat.shape[0]
    rows = _rows_for(n)
    pad = rows * LANE - n
    if pad:
        flat = jnp.pad(flat, (0, pad))
    return flat.reshape(rows, LANE)


def unflatten_dense(flat2d, like_tensors):
    flat = flat2d.reshape(-1)
    out, off = [], 0
    for t in like_tensors:
        n = t.size
        out.append(flat[off:off + n].reshape(t.shape))
        off += n
    return out


# ---------------------------------------------------------------------------
# Kernel 1: flat_dist_call([...], dist.broadcast, (0,))
#   Single copy of the rank-0 flat slab into the synced buffer; every
#   simulated rank logically aliases that buffer (no W redundant HBM copies).
# ---------------------------------------------------------------------------
def _copy_kernel(src_ref, out_ref):
    out_ref[...] = src_ref[...]


def flat_broadcast(flat_rank0_2d):
    rows, lanes = flat_rank0_2d.shape
    assert lanes == LANE
    tile = _tile_for_rows(rows)
    assert rows % tile == 0
    itemsize = jnp.dtype(flat_rank0_2d.dtype).itemsize
    nbytes = rows * LANE * itemsize
    return pl.pallas_call(
        _copy_kernel,
        out_shape=jax.ShapeDtypeStruct((rows, LANE), flat_rank0_2d.dtype),
        grid=(rows // tile,),
        in_specs=[pl.BlockSpec((tile, LANE), lambda i: (i, 0))],
        out_specs=pl.BlockSpec((tile, LANE), lambda i: (i, 0)),
        compiler_params=pltpu.CompilerParams(
            dimension_semantics=("parallel",),
            vmem_limit_bytes=FLAT_VMEM_LIMIT),
        cost_estimate=pl.CostEstimate(
            flops=0, transcendentals=0, bytes_accessed=2 * nbytes),
    )(flat_rank0_2d)


# ---------------------------------------------------------------------------
# Kernel 2: flat_dist_call(grads, dist.all_reduce); coalesced /= world_size
#   Input: rank-stacked [W, rows, 128] grads.  Output: [rows, 128] mean,
#   written once.  The leading-axis reduction is W-1 plain VPU adds in f32.
# ---------------------------------------------------------------------------
def _allreduce_mean_kernel(g_ref, out_ref):
    # g_ref: (W, row_tile, 128)   out_ref: (row_tile, 128)
    w = g_ref.shape[0]
    s = jnp.sum(g_ref[...].astype(jnp.float32), axis=0)
    out_ref[...] = (s * (1.0 / w)).astype(out_ref.dtype)


def flat_allreduce_mean(flat_grads_all_ranks):
    W, rows, lanes = flat_grads_all_ranks.shape
    assert lanes == LANE
    tile = _tile_for_rows(rows)
    assert rows % tile == 0
    itemsize = jnp.dtype(flat_grads_all_ranks.dtype).itemsize
    nbytes = (W + 1) * rows * LANE * itemsize
    # TODO(synk): with input_output_aliases the mean could be reduced in place
    # into the rank-0 grad slab (true DDP in-place semantics); a real
    # multi-chip deployment would instead use pltpu.make_async_remote_copy +
    # get_barrier_semaphore ring/blast all-reduce bucketed by message_size.
    return pl.pallas_call(
        _allreduce_mean_kernel,
        out_shape=jax.ShapeDtypeStruct((rows, LANE),
                                       flat_grads_all_ranks.dtype),
        grid=(rows // tile,),
        in_specs=[pl.BlockSpec((W, tile, LANE), lambda i: (0, i, 0))],
        out_specs=pl.BlockSpec((tile, LANE), lambda i: (i, 0)),
        compiler_params=pltpu.CompilerParams(
            dimension_semantics=("parallel",),
            vmem_limit_bytes=FLAT_VMEM_LIMIT),
        cost_estimate=pl.CostEstimate(
            flops=W * rows * LANE, transcendentals=0, bytes_accessed=nbytes),
    )(flat_grads_all_ranks)


# ---------------------------------------------------------------------------
# Kernel 3: wrapped module forward (DDP.forward delegates to it):
#           y = x @ W.T + b,  Linear(H -> O), PyTorch weight layout (O, H).
# Small shapes (the actual forward): one fused block, M padded only to a
# multiple of 8, full-array K/N blocks, no K grid / scratch / pl.when.
# Large shapes: tiled MXU path, f32 accumulator, 256-multiple N/K tiles.
# ---------------------------------------------------------------------------
def _linear_small_kernel(x_ref, w_ref, b_ref, o_ref):
    acc = jnp.dot(x_ref[...], w_ref[...],
                  preferred_element_type=jnp.float32,
                  precision=jax.lax.Precision.HIGHEST)
    o_ref[...] = (acc + b_ref[...]).astype(o_ref.dtype)


def _linear_tiled_kernel(x_ref, w_ref, b_ref, o_ref, acc_ref):
    k = pl.program_id(2)

    @pl.when(k == 0)
    def _():
        acc_ref[...] = jnp.zeros_like(acc_ref)

    acc_ref[...] += jnp.dot(x_ref[...], w_ref[...],
                            preferred_element_type=jnp.float32,
                            precision=jax.lax.Precision.HIGHEST)

    @pl.when(k == pl.num_programs(2) - 1)
    def _():
        o_ref[...] = (acc_ref[...] + b_ref[...]).astype(o_ref.dtype)


def linear_forward(x_2d, w_ho, bias_o, *, tm=128, tn=256, tk=256):
    M, K = x_2d.shape
    K2, N = w_ho.shape
    assert K == K2
    b2d = bias_o.reshape(1, N)

    # Single-block path for latency-dominated small shapes (the real forward).
    if max(M, K, N) <= 512:
        Mp = _round_up(M, SUBLANE)
        xp = jnp.pad(x_2d, ((0, Mp - M), (0, 0))) if Mp != M else x_2d
        out = pl.pallas_call(
            _linear_small_kernel,
            out_shape=jax.ShapeDtypeStruct((Mp, N), x_2d.dtype),
        )(xp, w_ho, b2d)
        return out[:M, :]

    # Tiled MXU path for production shapes.
    # TODO(synk): on v6e/v7x feed bf16 operands (f32 accum) and re-check the
    # tile VMEM budget against v7x's 64 MiB VMEM before scaling tm/tn/tk.
    Mp, Kp, Np = _round_up(M, tm), _round_up(K, tk), _round_up(N, tn)
    xp = jnp.pad(x_2d, ((0, Mp - M), (0, Kp - K)))
    wp = jnp.pad(w_ho, ((0, Kp - K), (0, Np - N)))
    bp = jnp.pad(b2d, ((0, 0), (0, Np - N)))
    out = pl.pallas_call(
        _linear_tiled_kernel,
        out_shape=jax.ShapeDtypeStruct((Mp, Np), x_2d.dtype),
        grid_spec=pltpu.PrefetchScalarGridSpec(
            num_scalar_prefetch=0,
            grid=(Mp // tm, Np // tn, Kp // tk),
            in_specs=[
                pl.BlockSpec((tm, tk), lambda i, j, k: (i, k)),
                pl.BlockSpec((tk, tn), lambda i, j, k: (k, j)),
                pl.BlockSpec((1, tn), lambda i, j, k: (0, j)),
            ],
            out_specs=pl.BlockSpec((tm, tn), lambda i, j, k: (i, j)),
            scratch_shapes=[pltpu.VMEM((tm, tn), jnp.float32)]),
        compiler_params=pltpu.CompilerParams(
            dimension_semantics=("parallel", "parallel", "arbitrary")),
    )(xp, wp, bp)
    return out[:M, :N]


# ---------------------------------------------------------------------------
# The DDP wrapper.
# ---------------------------------------------------------------------------
class DistributedDataParallelJAX:
    def __init__(self, weight_oh, bias_o, message_size=10_000_000,
                 shared_param=False):
        self.message_size = message_size
        self.shared_param = shared_param
        self.param_refs = []
        self.record = []

        params = [weight_oh, bias_o]
        # __init__: broadcast rank-0 flattened params (Pallas copy kernel);
        # every simulated rank logically aliases the synced slab.
        flat0 = flatten_dense(params)                # (rows, 128) rank-0 slab
        self.flat_params = flat_broadcast(flat0)     # synced slab (one copy)
        synced = unflatten_dense(self.flat_params, params)
        self.weight, self.bias = synced
        # Hoist the (O, H) -> (H, O) transpose out of the per-step forward.
        self.weight_ho = jnp.transpose(self.weight)

    def rank_flat_params(self, rank):
        # dist.broadcast(src=0) semantics: every rank holds rank-0's data.
        return self.flat_params

    def forward(self, x_bsh):
        # DDP bookkeeping (needs_refresh / param_state / ready buckets) is
        # host-side control flow with no tensor math; reproduce the flags.
        self.needs_refresh = not self.param_refs or self.shared_param
        if self.needs_refresh:
            self.record = []
        self.param_refs = [self.weight, self.bias]
        self.param_state = [0 for _ in self.param_refs]
        self.needs_reduction = True
        self.ready_start = 0
        self.ready_end = 0
        self.ready_params = []
        self.ready_numel = 0
        # forward == wrapped module forward (Linear)
        Bn, Sn, Hn = x_bsh.shape
        out_dim = self.weight.shape[0]
        y2d = linear_forward(x_bsh.reshape(Bn * Sn, Hn),
                             self.weight_ho, self.bias)
        return y2d.reshape(Bn, Sn, out_dim)

    def allreduce_grads(self, grads_per_rank):
        # backward-hook path: flatten grads per rank (sublane-dense slabs),
        # all_reduce + average over the rank axis, broadcast logically.
        flat = jnp.stack([flatten_dense(g) for g in grads_per_rank])
        mean_flat = flat_allreduce_mean(flat)        # single (rows, 128) mean
        mean_grads = unflatten_dense(mean_flat, grads_per_rank[0])
        return [mean_grads for _ in range(len(grads_per_rank))]

    # TODO(synk): CUDA streams/events and comm_ready_buckets overlap
    # scheduling have no single-host Pallas equivalent; the numerical effect
    # (averaged flat gradients per bucket) is what is reproduced here.


if __name__ == "__main__":
    key = jax.random.PRNGKey(0)
    k_w, k_b, k_x, k_g = jax.random.split(key, 4)

    weight = jax.random.normal(k_w, (O, H), dtype=jnp.float32) * 0.1
    bias = jax.random.normal(k_b, (O,), dtype=jnp.float32) * 0.1
    x = jax.random.normal(k_x, (B, S, H), dtype=jnp.float32)

    ddp = DistributedDataParallelJAX(weight, bias)

    # --- forward ---
    y = jax.block_until_ready(ddp.forward(x))
    y_ref = x.reshape(-1, H) @ weight.T + bias
    assert jnp.allclose(y.reshape(-1, O), y_ref, atol=1e-5, rtol=1e-5)

    # --- broadcast check: synced params equal rank-0 params, and every rank's
    #     logical view aliases the single synced slab (no W HBM copies) ---
    assert jnp.allclose(ddp.weight, weight)
    assert jnp.allclose(ddp.bias, bias)
    flat0 = flatten_dense([weight, bias])
    assert jnp.allclose(ddp.flat_params, flat0)
    for r in range(WORLD_SIZE):
        assert ddp.rank_flat_params(r) is ddp.flat_params

    # --- simulated gradient all-reduce + average (backward-hook semantics) ---
    grads_per_rank = []
    for r in range(WORLD_SIZE):
        kr = jax.random.fold_in(k_g, r)
        gw = jax.random.normal(kr, (O, H), dtype=jnp.float32)
        gb = jax.random.normal(jax.random.fold_in(kr, 1), (O,),
                               dtype=jnp.float32)
        grads_per_rank.append([gw, gb])
    synced = ddp.allreduce_grads(grads_per_rank)
    jax.block_until_ready(synced[0][0])
    gw_mean = sum(g[0] for g in grads_per_rank) / WORLD_SIZE
    gb_mean = sum(g[1] for g in grads_per_rank) / WORLD_SIZE
    for r in range(WORLD_SIZE):
        assert jnp.allclose(synced[r][0], gw_mean, atol=1e-5)
        assert jnp.allclose(synced[r][1], gb_mean, atol=1e-5)

    print("KERNEL_OK")
</pallas_src>

<mosaic_0001>
module attributes {stable_mosaic.version = 11 : i64} {
  func.func @_copy_kernel(%arg0: i32, %arg1: memref<16x128xf32, #tpu.memory_space<vmem>>, %arg2: memref<16x128xf32, #tpu.memory_space<vmem>>) attributes {dimension_semantics = [#tpu.dimension_semantics<parallel>], iteration_bounds = array<i64: 1>, scalar_prefetch = 0 : i64, scratch_operands = 0 : i64, tpu.core_type = #tpu.core_type<tc>, window_params = [{transform_indices = @transform_0, window_bounds = array<i64: 16, 128>}, {transform_indices = @transform_1, window_bounds = array<i64: 16, 128>}]} {
    %c0 = arith.constant 0 : index
    %c0_0 = arith.constant 0 : index
    %0 = vector.load %arg1[%c0, %c0_0] : memref<16x128xf32, #tpu.memory_space<vmem>>, vector<16x128xf32>
    %c0_1 = arith.constant 0 : index
    %c0_2 = arith.constant 0 : index
    %1 = vector.load %arg2[%c0_1, %c0_2] : memref<16x128xf32, #tpu.memory_space<vmem>>, vector<16x128xf32>
    tpu.vector_store %arg2[%c0_1, %c0_2], %0 {strides = array<i32>} : memref<16x128xf32, #tpu.memory_space<vmem>>, vector<16x128xf32>,
    return
  }
  func.func @transform_0(%arg0: i32) -> (i32, i32) {
    %c0_i32 = arith.constant 0 : i32
    %c0_i32_0 = arith.constant 0 : i32
    return %arg0, %c0_i32 : i32, i32
  }
  func.func @transform_1(%arg0: i32) -> (i32, i32) {
    %c0_i32 = arith.constant 0 : i32
    %c0_i32_0 = arith.constant 0 : i32
    return %arg0, %c0_i32 : i32, i32
  }
}

</mosaic_0001>

<llo_original>
// kernel: tpu_custom_call.1
$region0: #{tpu_custom_call.1}
  #allocation0 [shape = 'u32[]', space=smem, size = 0x4, offset = 0x4, fixed_abs, tag = 'smem constant byte address 0x4 - core index']
  #allocation1 [shape = 'u32[144,128]{1,0:T(1,128)}', space=vmem, size = 0x12000, scoped, tag = 'internal scratch']
  %s0 = inlined_call_operand.hbm [shape: f32[16,128], index: 0, kind: input, shape index: {}]
  %s1 = inlined_call_operand.hbm [shape: f32[16,128], index: 1, kind: output, shape index: {}]
  %s2 = sld [smem:[#allocation0]]
  $region18: #{tpu_custom_call.1} parent=0
    _
  %s4 = ssub.s32 1, %s2
  %s5 = scalar_select 0, %s4, %s2
  $region1: #{tpu_custom_call.1} parent=0
    #allocation2 [shape = 'u8[8192]{0}', space=vmem, size = 0x2000, scoped, tag = 'input window, operand 0, single buffered']
    #allocation3 [shape = 's32[1]{0}', space=sflag, size = 0x4, scoped, tag = 'scoped memory for tpu_custom_call.1']
    #allocation4 [shape = 's32[1]{0}', space=sflag, size = 0x4, scoped, tag = 'scoped memory for tpu_custom_call.1']
    #allocation5 [shape = 'u8[8192]{0}', space=vmem, size = 0x2000, scoped, tag = 'output window, operand 0, single buffered']
    %6 = vsyncpa [#allocation3], 0
    %7 = vsyncpa [#allocation4], 0
    // Predicated region
    $region2: #{tpu_custom_call.1} parent=1 // pred_check
      _
    $region3: #{tpu_custom_call.1} parent=1 // pred_check_branch
      %9 = sbr.rel (0) target = $region5
    $region4: #{tpu_custom_call.1} parent=1 // pred_region
      %s11 = ssub.s32 256, 256
      %12 = vsyncadd [#allocation3], %s11
      %s13 = sshll.u32 [#allocation2], 4
      %s14 = int_to_ptr.vmem [resolvable:$true] %s13
      %19 = dma.hbm_to_vmem [thread:$0]  %s0, 256, %s14, [#allocation3], 128, 128, 8
    $region5: #{tpu_custom_call.1} parent=1 // pred_fallthru
      _
    // Predicated region
    $region6: #{tpu_custom_call.1} parent=1 // pred_check
      _
    $region7: #{tpu_custom_call.1} parent=1 // pred_check_branch
      %21 = sbr.rel (0) target = $region9
    $region8: #{tpu_custom_call.1} parent=1 // pred_region
      %22 = dma.done [#allocation3], 256
    $region9: #{tpu_custom_call.1} parent=1 // pred_fallthru
      _
    %v23 = vld [vmem:[#allocation2] sm:$0xff]
    %v24 = vld [vmem:[#allocation2 + $0x8] sm:$0xff]
    %25 = vst [vmem:[#allocation5] sm:$0xff] %v23
    %26 = vst [vmem:[#allocation5 + $0x8] sm:$0xff] %v24
    // Predicated region
    $region10: #{tpu_custom_call.1} parent=1 // pred_check
      _
    $region11: #{tpu_custom_call.1} parent=1 // pred_check_branch
      %28 = sbr.rel (0) target = $region13
    $region12: #{tpu_custom_call.1} parent=1 // pred_region
      %s30 = ssub.s32 256, 256
      %31 = vsyncadd [#allocation4], %s30
      %s32 = sshll.u32 [#allocation5], 4
      %s33 = int_to_ptr.vmem [resolvable:$true] %s32
      %38 = dma.vmem_to_hbm [thread:$0]  %s33, 256, %s1, [#allocation4], 128, 128, 8
    $region13: #{tpu_custom_call.1} parent=1 // pred_fallthru
      _
    // Predicated region
    $region14: #{tpu_custom_call.1} parent=1 // pred_check
      _
    $region15: #{tpu_custom_call.1} parent=1 // pred_check_branch
      %40 = sbr.rel (0) target = $region17
    $region16: #{tpu_custom_call.1} parent=1 // pred_region
      %41 = dma.done [#allocation4], 256
    $region17: #{tpu_custom_call.1} parent=1 // pred_fallthru
      _
    %42 = vsyncpa [#allocation3], 1
    %43 = vsyncpa [#allocation4], 1

</llo_original>
